<compile_context>
chip_gen: v6e
topology: v6e:2x2x1
jax: 0.10.0
libtpu: 0.0.40
codegen_flags: <defaults>
</compile_context>

<pallas_src>
import jax
import jax.numpy as jnp
from jax.experimental import pallas as pl
from jax.experimental.pallas import tpu as pltpu


# ----------------------------------------------------------------------------
# Helpers
# ----------------------------------------------------------------------------
_LANE = 128
_SMALL_FASTPATH_BYTES = 2 << 20  # single-block (no grid) only for tiny arrays


def _round_up(n: int, m: int) -> int:
    return ((n + m - 1) // m) * m


def _sublane_pack(dtype) -> int:
    """Rows-per-vreg for this dtype: 8 (f32), 16 (bf16), 32 (int8/fp8)."""
    itemsize = jnp.dtype(dtype).itemsize
    return max(8, 32 // max(itemsize, 1))


def _default_vmem_budget_bytes() -> int:
    """Per-chip budget for the (in+out) x double-buffered working set."""
    cap = 64 << 20  # most conservative generation (v7x per-TC VMEM)
    try:
        cap = int(getattr(pltpu.get_tpu_info(), "vmem_capacity_bytes", cap))
    except Exception:
        pass
    # <= 1/4 of physical VMEM, capped at 24 MiB: plenty to sit on the HBM
    # roofline while leaving headroom for compiler scratch on every
    # generation (v5e/v6e: 128 MiB physical, v7x: 64 MiB).
    return min(cap // 4, 24 << 20)


def _pick_tiles(rows: int, cols: int, dtype, budget: int):
    """Lane-dense tile keeping (in + out) x double-buffer <= budget."""
    itemsize = jnp.dtype(dtype).itemsize
    sub = _sublane_pack(dtype)
    bytes_per_elem = 4 * itemsize  # in + out, each double-buffered

    # Lane dim first: full column extent (one wide slab) if `sub` rows of it
    # fit the budget; otherwise the largest 128-multiple that does.  A block
    # narrower than the array only needs to be 128-divisible; ragged column
    # edges are masked by the cdiv grid.
    if sub * cols * bytes_per_elem <= budget or cols < _LANE:
        tile_c = cols  # full extent (always a legal block shape)
    else:
        tile_c = (budget // (sub * bytes_per_elem)) // _LANE * _LANE
        tile_c = max(_LANE, min(tile_c, cols))

    # Sublane dim: as many sublane-multiples as fit; ragged last row-block is
    # handled by the cdiv grid (never fall back to an over-budget full extent).
    max_rows = max(sub, (budget // (tile_c * bytes_per_elem)) // sub * sub)
    tile_r = rows if rows <= max_rows else max_rows
    return tile_r, tile_c


# ----------------------------------------------------------------------------
# Primary identity: single HBM->HBM DMA (no VMEM round-trip, no grid).
# ----------------------------------------------------------------------------
def _hbm_copy_kernel(x_hbm_ref, o_hbm_ref, sem):
    cp = pltpu.make_async_copy(x_hbm_ref, o_hbm_ref, sem)
    cp.start()
    cp.wait()


def pallas_identity(x: jax.Array) -> jax.Array:
    """Identity copy as one direct HBM->HBM DMA.  Works for any rank."""
    return pl.pallas_call(
        _hbm_copy_kernel,
        out_shape=jax.ShapeDtypeStruct(x.shape, x.dtype),
        in_specs=[pl.BlockSpec(memory_space=pl.ANY)],
        out_specs=pl.BlockSpec(memory_space=pl.ANY),
        scratch_shapes=[pltpu.SemaphoreType.DMA(())],
    )(x)


# ----------------------------------------------------------------------------
# Secondary identity: BlockSpec/grid VMEM path (where per-tile compute would
# live if the reference module had any).
# ----------------------------------------------------------------------------
def _copy_kernel(x_ref, o_ref):
    o_ref[...] = x_ref[...]


def pallas_identity_tiled(x: jax.Array, *, vmem_budget_bytes: int | None = None) -> jax.Array:
    """Tiled identity copy through VMEM with chip-aware tiling."""
    if vmem_budget_bytes is None:
        vmem_budget_bytes = _default_vmem_budget_bytes()

    orig_shape = x.shape
    if x.ndim == 1:
        x2d = x.reshape(1, -1)
    elif x.ndim == 2:
        x2d = x
    else:
        x2d = x.reshape(-1, x.shape[-1])  # collapse leading dims; last dim = lanes

    rows, cols = x2d.shape
    itemsize = jnp.dtype(x.dtype).itemsize
    total_bytes = rows * cols * itemsize
    sub = _sublane_pack(x.dtype)

    # Tiny arrays: one full-array block, no grid loop.  Threshold also bounded
    # by the budget so a small budget still exercises the pipelined grid.
    if total_bytes <= min(_SMALL_FASTPATH_BYTES, vmem_budget_bytes):
        y2d = pl.pallas_call(
            _copy_kernel,
            out_shape=jax.ShapeDtypeStruct((rows, cols), x.dtype),
            compiler_params=pltpu.CompilerParams(
                vmem_limit_bytes=2 * total_bytes + (4 << 20),
            ),
        )(x2d)
        return y2d.reshape(orig_shape)

    tile_r, tile_c = _pick_tiles(rows, cols, x.dtype, vmem_budget_bytes)

    # Ensure enough blocks that (a) input prefetch overlaps output writeback
    # and (b) both v7x TensorCores get work along the 'parallel' row axis.
    target_blocks = 4
    if pl.cdiv(rows, tile_r) * pl.cdiv(cols, tile_c) < target_blocks and rows > sub:
        tile_r = min(tile_r, max(sub, _round_up(pl.cdiv(rows, target_blocks), sub)))

    grid = (pl.cdiv(rows, tile_r), pl.cdiv(cols, tile_c))
    working_set = 4 * tile_r * tile_c * itemsize  # in + out, double-buffered

    y2d = pl.pallas_call(
        _copy_kernel,
        out_shape=jax.ShapeDtypeStruct((rows, cols), x.dtype),
        grid=grid,
        in_specs=[pl.BlockSpec((tile_r, tile_c), lambda i, j: (i, j))],
        out_specs=pl.BlockSpec((tile_r, tile_c), lambda i, j: (i, j)),
        compiler_params=pltpu.CompilerParams(
            dimension_semantics=("parallel", "parallel"),
            vmem_limit_bytes=working_set + (4 << 20),
        ),
    )(x2d)
    return y2d.reshape(orig_shape)


# ----------------------------------------------------------------------------
# Faithful port of the (empty) PyTorch module.
# ----------------------------------------------------------------------------
class TransformerBlock:
    """JAX/Pallas counterpart of the reference nn.Module.

    The reference __init__ defines no parameters and forward() is `pass`,
    i.e. it accepts no inputs and returns None.  We mirror that exactly.
    """

    def __init__(self):
        # Reference __init__ body is `pass`: no parameters to initialize.
        pass

    def forward(self):
        # Reference forward body is `pass`: no computation, returns None.
        # TODO(synk): reference forward is empty — there is no transformer
        # math to lower into a Pallas kernel; the identity kernels above only
        # exercise the pallas_call plumbing.
        return None

    __call__ = forward


if __name__ == "__main__":
    key = jax.random.PRNGKey(0)
    k1, k2, k3, k4 = jax.random.split(key, 4)

    # 1) Faithful (empty) module forward.
    block = TransformerBlock()
    assert block() is None, "reference forward() returns None"

    # 2) Primary path: direct HBM->HBM DMA identity, 2-D input.
    x1 = jax.random.normal(k1, (8, 128), dtype=jnp.float32)
    y1 = pallas_identity(x1)
    jax.block_until_ready(y1)
    assert jnp.array_equal(y1, x1), "DMA identity (2-D) mismatch"

    # 3) Primary path is rank-agnostic: 3-D input.
    x2 = jax.random.normal(k2, (2, 16, 128), dtype=jnp.float32)
    y2 = pallas_identity(x2)
    jax.block_until_ready(y2)
    assert jnp.array_equal(y2, x2), "DMA identity (3-D) mismatch"

    # 4) Tiled path, tiny bf16 input -> single-block fast path (no grid).
    x3 = jax.random.normal(k3, (64, 256), dtype=jnp.float32).astype(jnp.bfloat16)
    y3 = pallas_identity_tiled(x3)
    jax.block_until_ready(y3)
    assert jnp.array_equal(y3, x3), "tiled identity (fast path) mismatch"

    # 5) Tiled path, forced multi-block grid via a small budget; rows are not
    #    a tile multiple, exercising the masked ragged edge block.
    x4 = jax.random.normal(k4, (200, 640), dtype=jnp.float32)
    y4 = pallas_identity_tiled(x4, vmem_budget_bytes=256 * 1024)
    jax.block_until_ready(y4)
    assert jnp.array_equal(y4, x4), "tiled identity (grid path) mismatch"

    print("KERNEL_OK")
</pallas_src>

<mosaic_0001>
module attributes {stable_mosaic.version = 11 : i64} {
  func.func @_hbm_copy_kernel(%arg0: memref<8x128xf32, #tpu.memory_space<any>>, %arg1: memref<8x128xf32, #tpu.memory_space<any>>, %arg2: memref<!tpu.dma_semaphore, #tpu.memory_space<semaphore_mem>>) attributes {dimension_semantics = [], scalar_prefetch = 0 : i64, scratch_operands = 1 : i64, tpu.core_type = #tpu.core_type<tc>} {
    tpu.enqueue_dma source(%arg0 : memref<8x128xf32, #tpu.memory_space<any>>) target(%arg1 : memref<8x128xf32, #tpu.memory_space<any>>) target_semaphore(%arg2 : memref<!tpu.dma_semaphore, #tpu.memory_space<semaphore_mem>>)
    tpu.wait_dma2 semaphore(%arg2 : memref<!tpu.dma_semaphore, #tpu.memory_space<semaphore_mem>>) src(%arg0 : memref<8x128xf32, #tpu.memory_space<any>>) dst(%arg1 : memref<8x128xf32, #tpu.memory_space<any>>)
    return
  }
}

</mosaic_0001>

<llo_original>
// kernel: tpu_custom_call.1
$region0: #{tpu_custom_call.1}
  #allocation0 [shape = 'u32[]', space=smem, size = 0x4, offset = 0x4, fixed_abs, tag = 'smem constant byte address 0x4 - core index']
  #allocation1 [shape = 'u32[144,128]{1,0:T(1,128)}', space=vmem, size = 0x12000, scoped, tag = 'internal scratch']
  #allocation2 [shape = 's32[1]{0}', space=sflag, size = 0x4, scoped, tag = 'scratch operand']
  #allocation3 [shape = 's32[]', space=sflag, size = 0x4, offset = 0, fixed_abs, tag = 'sflag constant byte address 0x0 - dummy sync flag']
  #allocation4 [shape = 'u32[0]{0}', space=smem, size = 0, offset = 0, fixed_abs, tag = 'smem constant byte address 0x0 - null']
  %s0 = inlined_call_operand.hbm [shape: f32[8,128], index: 0, kind: input, shape index: {}]
  %s1 = inlined_call_operand.hbm [shape: f32[8,128], index: 1, kind: output, shape index: {}]
  %s2 = sld [smem:[#allocation0]]
  $region2: #{tpu_custom_call.1} parent=0
    _
  %s4 = ssub.s32 1, %s2
  %s5 = scalar_select 0, %s4, %s2
  %s7 = sshll.u32 1, 14
  %s8 = sxor.u32 4294967295, %s7
  %12 = dma.general %s0, 128, %s1, [#allocation2], 131072, [#allocation4], 0, 0
  %s13 = smul.u32 8, 1
  %s14 = sshll.u32 %s13, 4
  %15 = dma.done [#allocation2], %s14
  %16 = vsyncmov [#allocation2]
  %s17 = vpop.sfrf %16
  %p18 = scmp.eq.s32.totalorder %s17, 0
  %p19 = pneg %p18
  %21 = shalt.err (%p19)

</llo_original>
